<compile_context>
chip_gen: v7x
topology: tpu7x:2x2x1
jax: 0.10.0
libtpu: 0.0.40
codegen_flags: <defaults>
</compile_context>

<pallas_src>
import jax
import jax.numpy as jnp
from jax import lax
from jax.experimental import pallas as pl
from jax.experimental.pallas import tpu as pltpu


def _round_up(x, m):
    return (x + m - 1) // m * m


# ---------------------------------------------------------------------------
# Pallas kernel:  act( sum_g (X_g @ W_g) * s_g + b_g  [+ residual] )
# ---------------------------------------------------------------------------
def _make_kernel(num_groups: int, apply_relu: bool, has_residual: bool):
    def kernel(*refs):
        o_ref = refs[-1]
        idx = 0
        out = None
        for _ in range(num_groups):
            x_ref, w_ref, s_ref, b_ref = refs[idx:idx + 4]
            idx += 4
            # bf16 x bf16 -> f32 accumulation on the MXU, single matmul
            # with the 9 conv taps folded into K.
            acc = jnp.dot(x_ref[...], w_ref[...],
                          preferred_element_type=jnp.float32)
            term = acc * s_ref[...] + b_ref[...]        # folded BN, f32 epilogue
            out = term if out is None else out + term
        if has_residual:
            out = out + refs[idx][...].astype(jnp.float32)
        if apply_relu:
            out = jnp.maximum(out, 0.0)
        o_ref[...] = out.astype(o_ref.dtype)            # lane-dense (Cp % 128 == 0)
    return kernel


def _pick_tm(M, group_ks, Cp, has_residual, budget=20 << 20):
    """Largest M-tile whose double-buffered working set fits the VMEM budget."""
    # Weights + folded-BN vectors (count double-buffered, conservatively).
    fixed = sum(2 * (k * Cp * 2 + 2 * Cp * 4) for k in group_ks)
    # Per-row double-buffered bytes: bf16 activations per group, optional f32
    # residual, f32 output tile.
    per_row = 2 * (sum(2 * k for k in group_ks)
                   + (Cp * 4 if has_residual else 0) + Cp * 4)
    tm = (budget - fixed) // max(per_row, 1)
    tm = int(max(128, min(1024, tm)))
    tm = min(tm, _round_up(M, 16))
    return max(16, (tm // 16) * 16)                     # bf16 sublane granule


def fused_matmul_bn_act(groups, residual=None, relu=True,
                        out_dtype=jnp.float32):
    """groups: list of (x:(M,Kg) bf16, w:(Kg,Cp) bf16, scale:(1,Cp) f32,
    bias:(1,Cp) f32).  residual: optional (M,Cp) f32.  Returns (M,Cp)."""
    M = groups[0][0].shape[0]
    Cp = groups[0][1].shape[1]
    assert Cp % 128 == 0

    tm = _pick_tm(M, [g[0].shape[1] for g in groups], Cp, residual is not None)
    Mp = _round_up(M, tm)

    args, in_specs = [], []
    for (x, w, s, b) in groups:
        K = x.shape[1]
        if Mp != M:
            x = jnp.pad(x, ((0, Mp - M), (0, 0)))
        args += [x, w, s, b]
        in_specs += [
            pl.BlockSpec((tm, K), lambda i: (i, 0)),     # activations: tiled M
            pl.BlockSpec((K, Cp), lambda i: (0, 0)),     # weights: resident
            pl.BlockSpec((1, Cp), lambda i: (0, 0)),     # folded BN scale
            pl.BlockSpec((1, Cp), lambda i: (0, 0)),     # folded BN bias
        ]
    if residual is not None:
        r = residual if Mp == M else jnp.pad(residual, ((0, Mp - M), (0, 0)))
        args.append(r)
        in_specs.append(pl.BlockSpec((tm, Cp), lambda i: (i, 0)))

    out = pl.pallas_call(
        _make_kernel(len(groups), relu, residual is not None),
        out_shape=jax.ShapeDtypeStruct((Mp, Cp), out_dtype),
        grid=(Mp // tm,),
        in_specs=in_specs,
        out_specs=pl.BlockSpec((tm, Cp), lambda i: (i, 0)),
        compiler_params=pltpu.CompilerParams(
            dimension_semantics=("parallel",)),
    )(*args)
    return out[:M]


# ---------------------------------------------------------------------------
# Glue: im2col (single (M, 9*Cin) matrix), BN folding, weight reshaping
# ---------------------------------------------------------------------------
def conv3x3_im2col(x_nhwc, stride):
    """Returns (M, 9*Cin) patch matrix (dy-major, dx, Cin minor), Ho, Wo."""
    N, H, W, C = x_nhwc.shape
    xp = jnp.pad(x_nhwc, ((0, 0), (1, 1), (1, 1), (0, 0)))
    Ho = (H - 1) // stride + 1
    Wo = (W - 1) // stride + 1
    cols = []
    for dy in range(3):
        for dx in range(3):
            sl = xp[:,
                    dy:dy + (Ho - 1) * stride + 1:stride,
                    dx:dx + (Wo - 1) * stride + 1:stride, :]
            cols.append(sl.reshape(N * Ho * Wo, C))
    return jnp.concatenate(cols, axis=1), Ho, Wo


def fold_bn(gamma, beta, mean, var, cpad, eps=1e-5):
    scale = gamma * lax.rsqrt(var + eps)
    bias = beta - mean * scale
    scale = jnp.pad(scale, (0, cpad - scale.shape[0]))
    bias = jnp.pad(bias, (0, cpad - bias.shape[0]))
    return (scale[None, :].astype(jnp.float32),
            bias[None, :].astype(jnp.float32))


def torch_conv_w_to_matrix(w_oikk, cpad):
    """(Cout, Cin, kh, kw) -> (kh*kw*Cin, cpad) bf16, dy-major/dx/Cin rows,
    zero-padded output channels (lane-dense)."""
    Cout, Cin, kh, kw = w_oikk.shape
    w = jnp.transpose(w_oikk, (2, 3, 1, 0)).reshape(kh * kw * Cin, Cout)
    return jnp.pad(w, ((0, 0), (0, cpad - Cout))).astype(jnp.bfloat16)


# ---------------------------------------------------------------------------
# BasicBlock in Pallas
# ---------------------------------------------------------------------------
class BasicBlockPallas:
    def __init__(self, key, inplanes, planes, stride=1):
        # PyTorch spec creates the downsample only when inplanes != planes,
        # so stride > 1 with inplanes == planes is unsupported (shape bug in
        # the original module as well).
        assert stride == 1 or inplanes != planes
        self.inplanes, self.planes, self.stride = inplanes, planes, stride
        self.cpad = _round_up(planes, 128)
        ks = jax.random.split(key, 12)

        def bn_params(k):
            k1, k2, k3, k4 = jax.random.split(k, 4)
            gamma = 1.0 + 0.1 * jax.random.normal(k1, (planes,), jnp.float32)
            beta = 0.1 * jax.random.normal(k2, (planes,), jnp.float32)
            mean = 0.1 * jax.random.normal(k3, (planes,), jnp.float32)
            var = jax.random.uniform(k4, (planes,), jnp.float32, 0.5, 1.5)
            return gamma, beta, mean, var

        # conv1 / bn1
        self.w1 = 0.2 * jax.random.normal(ks[0], (planes, inplanes, 3, 3),
                                          jnp.float32)
        self.bn1 = bn_params(ks[1])
        # conv2 / bn2
        self.w2 = 0.2 * jax.random.normal(ks[2], (planes, planes, 3, 3),
                                          jnp.float32)
        self.bn2 = bn_params(ks[3])
        # downsample (1x1 conv + BN) only when inplanes != planes
        if inplanes != planes:
            self.w_ds = 0.2 * jax.random.normal(ks[4], (planes, inplanes, 1, 1),
                                                jnp.float32)
            self.bn_ds = bn_params(ks[5])
        else:
            self.w_ds = None
            self.bn_ds = None

        # Pre-folded kernel-ready parameters (bf16 weights, f32 scale/bias,
        # output channels zero-padded to a multiple of 128 lanes).
        self.w1m = torch_conv_w_to_matrix(self.w1, self.cpad)
        self.s1, self.b1 = fold_bn(*self.bn1, self.cpad)
        self.w2m = torch_conv_w_to_matrix(self.w2, self.cpad)
        self.s2, self.b2 = fold_bn(*self.bn2, self.cpad)
        if self.w_ds is not None:
            self.wdsm = torch_conv_w_to_matrix(self.w_ds, self.cpad)
            self.sds, self.bds = fold_bn(*self.bn_ds, self.cpad)
        else:
            self.wdsm = None

    # ---- Pallas forward (NCHW in, NCHW out; kernels work in NHWC-flat) ----
    def forward(self, x_nchw):
        x = jnp.transpose(x_nchw, (0, 2, 3, 1)).astype(jnp.float32)   # NHWC
        x_bf = x.astype(jnp.bfloat16)                                  # cast once
        N, H, W, Cin = x.shape
        planes, Cp = self.planes, self.cpad

        # conv1 + bn1 + relu1  ->  out1 kept bf16 + channel-padded.
        p1, Ho, Wo = conv3x3_im2col(x_bf, self.stride)
        out1 = fused_matmul_bn_act(
            [(p1, self.w1m, self.s1, self.b1)],
            relu=True, out_dtype=jnp.bfloat16)                 # (M, Cp)
        M = N * Ho * Wo

        # conv2 patches from out1 (drop the padded channels before im2col
        # so conv2's K stays 9*planes, not 9*Cp).
        out1_sp = out1[:, :planes].reshape(N, Ho, Wo, planes)
        p2, _, _ = conv3x3_im2col(out1_sp, 1)

        if self.wdsm is not None:
            # conv2+bn2 and the 1x1 downsample+bn fused in ONE kernel:
            # out = relu( bn2(conv2(out1)) + bn_ds(conv1x1(x_strided)) )
            xs = x_bf[:, ::self.stride, ::self.stride, :].reshape(M, Cin)
            out = fused_matmul_bn_act(
                [(p2, self.w2m, self.s2, self.b2),
                 (xs, self.wdsm, self.sds, self.bds)],
                relu=True, out_dtype=jnp.float32)
        else:
            # identity residual (f32, channel-padded for lane-dense access)
            resid = jnp.pad(x.reshape(M, Cin), ((0, 0), (0, Cp - Cin)))
            out = fused_matmul_bn_act(
                [(p2, self.w2m, self.s2, self.b2)],
                residual=resid, relu=True, out_dtype=jnp.float32)

        out = out[:, :planes].reshape(N, Ho, Wo, planes)
        return jnp.transpose(out, (0, 3, 1, 2))                # back to NCHW

    # ---- pure-JAX reference (mirrors the bf16 operand rounding of the MXU
    #      path; accumulation / epilogue in f32, same as the kernels) ----
    def reference(self, x_nchw):
        q = lambda a: a.astype(jnp.bfloat16).astype(jnp.float32)

        def conv(x_nhwc, w_oikk, stride):
            w_hwio = jnp.transpose(w_oikk, (2, 3, 1, 0))
            kh = w_oikk.shape[2]
            pad = ((1, 1), (1, 1)) if kh == 3 else ((0, 0), (0, 0))
            return lax.conv_general_dilated(
                q(x_nhwc), q(w_hwio), (stride, stride), pad,
                dimension_numbers=('NHWC', 'HWIO', 'NHWC'))

        def bn(y, params):
            gamma, beta, mean, var = params
            return gamma * (y - mean) * lax.rsqrt(var + 1e-5) + beta

        x = jnp.transpose(x_nchw, (0, 2, 3, 1)).astype(jnp.float32)
        if self.w_ds is not None:
            residual = bn(conv(x, self.w_ds, self.stride), self.bn_ds)
        else:
            residual = x
        out = jnp.maximum(bn(conv(x, self.w1, self.stride), self.bn1), 0.0)
        out = bn(conv(out, self.w2, 1), self.bn2) + residual
        out = jnp.maximum(out, 0.0)
        return jnp.transpose(out, (0, 3, 1, 2))


# ---------------------------------------------------------------------------
if __name__ == "__main__":
    key = jax.random.PRNGKey(0)
    kx, kp1, kp2 = jax.random.split(key, 3)

    # Case 1: inplanes != planes, stride 2 (exercises the fused downsample).
    x1 = jax.random.normal(kx, (2, 4, 16, 16), jnp.float32)
    blk1 = BasicBlockPallas(kp1, inplanes=4, planes=8, stride=2)
    y1 = jax.block_until_ready(jax.jit(blk1.forward)(x1))
    r1 = blk1.reference(x1)
    assert y1.shape == (2, 8, 8, 8), y1.shape
    assert bool(jnp.allclose(y1, r1, atol=1e-2, rtol=1e-2)), "mismatch case 1"

    # Case 2: inplanes == planes, stride 1 (identity residual).
    x2 = jax.random.normal(kx, (2, 8, 16, 16), jnp.float32)
    blk2 = BasicBlockPallas(kp2, inplanes=8, planes=8, stride=1)
    y2 = jax.block_until_ready(jax.jit(blk2.forward)(x2))
    r2 = blk2.reference(x2)
    assert y2.shape == (2, 8, 16, 16), y2.shape
    assert bool(jnp.allclose(y2, r2, atol=1e-2, rtol=1e-2)), "mismatch case 2"

    print("KERNEL_OK")
</pallas_src>

<mosaic_0001>
module attributes {stable_mosaic.version = 11 : i64} {
  func.func @kernel(%arg0: i32, %arg1: memref<128x36xbf16, #tpu.memory_space<vmem>>, %arg2: memref<36x128xbf16, #tpu.memory_space<vmem>>, %arg3: memref<1x128xf32, #tpu.memory_space<vmem>>, %arg4: memref<1x128xf32, #tpu.memory_space<vmem>>, %arg5: memref<128x128xbf16, #tpu.memory_space<vmem>>) attributes {dimension_semantics = [#tpu.dimension_semantics<parallel>], iteration_bounds = array<i64: 1>, scalar_prefetch = 0 : i64, scratch_operands = 0 : i64, tpu.core_type = #tpu.core_type<tc>, window_params = [{transform_indices = @transform_0, window_bounds = array<i64: 128, 36>}, {pipeline_mode = #tpu.pipeline_mode<synchronous>, transform_indices = @transform_1, window_bounds = array<i64: 36, 128>}, {pipeline_mode = #tpu.pipeline_mode<synchronous>, transform_indices = @transform_2, window_bounds = array<i64: 1, 128>}, {pipeline_mode = #tpu.pipeline_mode<synchronous>, transform_indices = @transform_3, window_bounds = array<i64: 1, 128>}, {transform_indices = @transform_4, window_bounds = array<i64: 128, 128>}]} {
    %c0 = arith.constant 0 : index
    %c0_0 = arith.constant 0 : index
    %0 = vector.load %arg1[%c0, %c0_0] : memref<128x36xbf16, #tpu.memory_space<vmem>>, vector<128x36xbf16>
    %c0_1 = arith.constant 0 : index
    %c0_2 = arith.constant 0 : index
    %1 = vector.load %arg2[%c0_1, %c0_2] : memref<36x128xbf16, #tpu.memory_space<vmem>>, vector<36x128xbf16>
    %cst = arith.constant dense<0.000000e+00> : vector<128x128xf32>
    %2 = tpu.matmul %0, %1, %cst {dimension_numbers = #tpu.dot_dimension_numbers<[1], [0], [0], [1], [0, 0, 1, 1], [], []>} : vector<128x36xbf16>, vector<36x128xbf16>, vector<128x128xf32> -> vector<128x128xf32>
    %c0_3 = arith.constant 0 : index
    %c0_4 = arith.constant 0 : index
    %3 = vector.load %arg3[%c0_3, %c0_4] : memref<1x128xf32, #tpu.memory_space<vmem>>, vector<1x128xf32>
    %4 = vector.broadcast %3 : vector<1x128xf32> to vector<128x128xf32>
    %5 = arith.mulf %2, %4 : vector<128x128xf32>
    %c0_5 = arith.constant 0 : index
    %c0_6 = arith.constant 0 : index
    %6 = vector.load %arg4[%c0_5, %c0_6] : memref<1x128xf32, #tpu.memory_space<vmem>>, vector<1x128xf32>
    %7 = vector.broadcast %6 : vector<1x128xf32> to vector<128x128xf32>
    %8 = arith.addf %5, %7 : vector<128x128xf32>
    %cst_7 = arith.constant 0.000000e+00 : f32
    %9 = vector.broadcast %cst_7 : f32 to vector<128x128xf32>
    %10 = arith.maximumf %8, %9 : vector<128x128xf32>
    %11 = arith.truncf %10 : vector<128x128xf32> to vector<128x128xbf16>
    %c0_8 = arith.constant 0 : index
    %c0_9 = arith.constant 0 : index
    %12 = vector.load %arg5[%c0_8, %c0_9] : memref<128x128xbf16, #tpu.memory_space<vmem>>, vector<128x128xbf16>
    tpu.vector_store %arg5[%c0_8, %c0_9], %11 {strides = array<i32>} : memref<128x128xbf16, #tpu.memory_space<vmem>>, vector<128x128xbf16>,
    return
  }
  func.func @transform_0(%arg0: i32) -> (i32, i32) {
    %c0_i32 = arith.constant 0 : i32
    %c0_i32_0 = arith.constant 0 : i32
    return %arg0, %c0_i32 : i32, i32
  }
  func.func @transform_1(%arg0: i32) -> (i32, i32) {
    %c0_i32 = arith.constant 0 : i32
    %c0_i32_0 = arith.constant 0 : i32
    %c0_i32_1 = arith.constant 0 : i32
    return %c0_i32, %c0_i32_0 : i32, i32
  }
  func.func @transform_2(%arg0: i32) -> (i32, i32) {
    %c0_i32 = arith.constant 0 : i32
    %c0_i32_0 = arith.constant 0 : i32
    %c0_i32_1 = arith.constant 0 : i32
    return %c0_i32, %c0_i32_0 : i32, i32
  }
  func.func @transform_3(%arg0: i32) -> (i32, i32) {
    %c0_i32 = arith.constant 0 : i32
    %c0_i32_0 = arith.constant 0 : i32
    %c0_i32_1 = arith.constant 0 : i32
    return %c0_i32, %c0_i32_0 : i32, i32
  }
  func.func @transform_4(%arg0: i32) -> (i32, i32) {
    %c0_i32 = arith.constant 0 : i32
    %c0_i32_0 = arith.constant 0 : i32
    return %arg0, %c0_i32 : i32, i32
  }
}

module attributes {stable_mosaic.version = 11 : i64} {
  func.func @kernel(%arg0: i32, %arg1: memref<128x72xbf16, #tpu.memory_space<vmem>>, %arg2: memref<72x128xbf16, #tpu.memory_space<vmem>>, %arg3: memref<1x128xf32, #tpu.memory_space<vmem>>, %arg4: memref<1x128xf32, #tpu.memory_space<vmem>>, %arg5: memref<128x4xbf16, #tpu.memory_space<vmem>>, %arg6: memref<4x128xbf16, #tpu.memory_space<vmem>>, %arg7: memref<1x128xf32, #tpu.memory_space<vmem>>, %arg8: memref<1x128xf32, #tpu.memory_space<vmem>>, %arg9: memref<128x128xf32, #tpu.memory_space<vmem>>) attributes {dimension_semantics = [#tpu.dimension_semantics<parallel>], iteration_bounds = array<i64: 1>, scalar_prefetch = 0 : i64, scratch_operands = 0 : i64, tpu.core_type = #tpu.core_type<tc>, window_params = [{transform_indices = @transform_0, window_bounds = array<i64: 128, 72>}, {pipeline_mode = #tpu.pipeline_mode<synchronous>, transform_indices = @transform_1, window_bounds = array<i64: 72, 128>}, {pipeline_mode = #tpu.pipeline_mode<synchronous>, transform_indices = @transform_2, window_bounds = array<i64: 1, 128>}, {pipeline_mode = #tpu.pipeline_mode<synchronous>, transform_indices = @transform_3, window_bounds = array<i64: 1, 128>}, {transform_indices = @transform_4, window_bounds = array<i64: 128, 4>}, {pipeline_mode = #tpu.pipeline_mode<synchronous>, transform_indices = @transform_5, window_bounds = array<i64: 4, 128>}, {pipeline_mode = #tpu.pipeline_mode<synchronous>, transform_indices = @transform_6, window_bounds = array<i64: 1, 128>}, {pipeline_mode = #tpu.pipeline_mode<synchronous>, transform_indices = @transform_7, window_bounds = array<i64: 1, 128>}, {transform_indices = @transform_8, window_bounds = array<i64: 128, 128>}]} {
    %c0 = arith.constant 0 : index
    %c0_0 = arith.constant 0 : index
    %0 = vector.load %arg1[%c0, %c0_0] : memref<128x72xbf16, #tpu.memory_space<vmem>>, vector<128x72xbf16>
    %c0_1 = arith.constant 0 : index
    %c0_2 = arith.constant 0 : index
    %1 = vector.load %arg2[%c0_1, %c0_2] : memref<72x128xbf16, #tpu.memory_space<vmem>>, vector<72x128xbf16>
    %cst = arith.constant dense<0.000000e+00> : vector<128x128xf32>
    %2 = tpu.matmul %0, %1, %cst {dimension_numbers = #tpu.dot_dimension_numbers<[1], [0], [0], [1], [0, 0, 1, 1], [], []>} : vector<128x72xbf16>, vector<72x128xbf16>, vector<128x128xf32> -> vector<128x128xf32>
    %c0_3 = arith.constant 0 : index
    %c0_4 = arith.constant 0 : index
    %3 = vector.load %arg3[%c0_3, %c0_4] : memref<1x128xf32, #tpu.memory_space<vmem>>, vector<1x128xf32>
    %4 = vector.broadcast %3 : vector<1x128xf32> to vector<128x128xf32>
    %5 = arith.mulf %2, %4 : vector<128x128xf32>
    %c0_5 = arith.constant 0 : index
    %c0_6 = arith.constant 0 : index
    %6 = vector.load %arg4[%c0_5, %c0_6] : memref<1x128xf32, #tpu.memory_space<vmem>>, vector<1x128xf32>
    %7 = vector.broadcast %6 : vector<1x128xf32> to vector<128x128xf32>
    %8 = arith.addf %5, %7 : vector<128x128xf32>
    %c0_7 = arith.constant 0 : index
    %c0_8 = arith.constant 0 : index
    %9 = vector.load %arg5[%c0_7, %c0_8] : memref<128x4xbf16, #tpu.memory_space<vmem>>, vector<128x4xbf16>
    %c0_9 = arith.constant 0 : index
    %c0_10 = arith.constant 0 : index
    %10 = vector.load %arg6[%c0_9, %c0_10] : memref<4x128xbf16, #tpu.memory_space<vmem>>, vector<4x128xbf16>
    %cst_11 = arith.constant dense<0.000000e+00> : vector<128x128xf32>
    %11 = tpu.matmul %9, %10, %cst_11 {dimension_numbers = #tpu.dot_dimension_numbers<[1], [0], [0], [1], [0, 0, 1, 1], [], []>} : vector<128x4xbf16>, vector<4x128xbf16>, vector<128x128xf32> -> vector<128x128xf32>
    %c0_12 = arith.constant 0 : index
    %c0_13 = arith.constant 0 : index
    %12 = vector.load %arg7[%c0_12, %c0_13] : memref<1x128xf32, #tpu.memory_space<vmem>>, vector<1x128xf32>
    %13 = vector.broadcast %12 : vector<1x128xf32> to vector<128x128xf32>
    %14 = arith.mulf %11, %13 : vector<128x128xf32>
    %c0_14 = arith.constant 0 : index
    %c0_15 = arith.constant 0 : index
    %15 = vector.load %arg8[%c0_14, %c0_15] : memref<1x128xf32, #tpu.memory_space<vmem>>, vector<1x128xf32>
    %16 = vector.broadcast %15 : vector<1x128xf32> to vector<128x128xf32>
    %17 = arith.addf %14, %16 : vector<128x128xf32>
    %18 = arith.addf %8, %17 : vector<128x128xf32>
    %cst_16 = arith.constant 0.000000e+00 : f32
    %19 = vector.broadcast %cst_16 : f32 to vector<128x128xf32>
    %20 = arith.maximumf %18, %19 : vector<128x128xf32>
    %c0_17 = arith.constant 0 : index
    %c0_18 = arith.constant 0 : index
    %21 = vector.load %arg9[%c0_17, %c0_18] : memref<128x128xf32, #tpu.memory_space<vmem>>, vector<128x128xf32>
    tpu.vector_store %arg9[%c0_17, %c0_18], %20 {strides = array<i32>} : memref<128x128xf32, #tpu.memory_space<vmem>>, vector<128x128xf32>,
    return
  }
  func.func @transform_0(%arg0: i32) -> (i32, i32) {
    %c0_i32 = arith.constant 0 : i32
    %c0_i32_0 = arith.constant 0 : i32
    return %arg0, %c0_i32 : i32, i32
  }
  func.func @transform_1(%arg0: i32) -> (i32, i32) {
    %c0_i32 = arith.constant 0 : i32
    %c0_i32_0 = arith.constant 0 : i32
    %c0_i32_1 = arith.constant 0 : i32
    return %c0_i32, %c0_i32_0 : i32, i32
  }
  func.func @transform_2(%arg0: i32) -> (i32, i32) {
    %c0_i32 = arith.constant 0 : i32
    %c0_i32_0 = arith.constant 0 : i32
    %c0_i32_1 = arith.constant 0 : i32
    return %c0_i32, %c0_i32_0 : i32, i32
  }
  func.func @transform_3(%arg0: i32) -> (i32, i32) {
    %c0_i32 = arith.constant 0 : i32
    %c0_i32_0 = arith.constant 0 : i32
    %c0_i32_1 = arith.constant 0 : i32
    return %c0_i32, %c0_i32_0 : i32, i32
  }
  func.func @transform_4(%arg0: i32) -> (i32, i32) {
    %c0_i32 = arith.constant 0 : i32
    %c0_i32_0 = arith.constant 0 : i32
    return %arg0, %c0_i32 : i32, i32
  }
  func.func @transform_5(%arg0: i32) -> (i32, i32) {
    %c0_i32 = arith.constant 0 : i32
    %c0_i32_0 = arith.constant 0 : i32
    %c0_i32_1 = arith.constant 0 : i32
    return %c0_i32, %c0_i32_0 : i32, i32
  }
  func.func @transform_6(%arg0: i32) -> (i32, i32) {
    %c0_i32 = arith.constant 0 : i32
    %c0_i32_0 = arith.constant 0 : i32
    %c0_i32_1 = arith.constant 0 : i32
    return %c0_i32, %c0_i32_0 : i32, i32
  }
  func.func @transform_7(%arg0: i32) -> (i32, i32) {
    %c0_i32 = arith.constant 0 : i32
    %c0_i32_0 = arith.constant 0 : i32
    %c0_i32_1 = arith.constant 0 : i32
    return %c0_i32, %c0_i32_0 : i32, i32
  }
  func.func @transform_8(%arg0: i32) -> (i32, i32) {
    %c0_i32 = arith.constant 0 : i32
    %c0_i32_0 = arith.constant 0 : i32
    return %arg0, %c0_i32 : i32, i32
  }
}

</mosaic_0001>

<llo_original>
// kernel: forward.3
$region0: #{forward.3}
  #allocation0 [shape = 'u32[]', space=smem, size = 0x4, offset = 0x4, fixed_abs, tag = 'smem constant byte address 0x4 - core index']
  #allocation1 [shape = 'u32[144,128]{1,0:T(1,128)}', space=vmem, size = 0x12000, scoped, tag = 'internal scratch']
  %s0 = inlined_call_operand.vmem [shape: bf16[128,72], index: 0, kind: input, shape index: {}]
  %s1 = inlined_call_operand.vmem [shape: bf16[72,128], index: 1, kind: input, shape index: {}]
  %s2 = inlined_call_operand.vmem [shape: f32[1,128], index: 2, kind: input, shape index: {}]
  %s3 = inlined_call_operand.vmem [shape: f32[1,128], index: 3, kind: input, shape index: {}]
  %s4 = inlined_call_operand.vmem [shape: bf16[128,4], index: 4, kind: input, shape index: {}]
  %s5 = inlined_call_operand.vmem [shape: bf16[4,128], index: 5, kind: input, shape index: {}]
  %s6 = inlined_call_operand.vmem [shape: f32[1,128], index: 6, kind: input, shape index: {}]
  %s7 = inlined_call_operand.vmem [shape: f32[1,128], index: 7, kind: input, shape index: {}]
  %s8 = inlined_call_operand.vmem [shape: f32[128,128], index: 8, kind: output, shape index: {}]
  %s9 = sld [smem:[#allocation0]]
  $region42: #{forward.3} parent=0
    _
  %s11 = ssub.s32 1, %s9
  %s12 = scalar_select 0, %s11, %s9
  // Predicated region
  $region2: #{forward.3} parent=0 // pred_check
    _
  $region3: #{forward.3} parent=0 // pred_check_branch
    %14 = sbr.rel (0) target = $region5
  $region4: #{forward.3} parent=0 // pred_region
    _
  $region5: #{forward.3} parent=0 // pred_fallthru
    _
  // Predicated region
  $region6: #{forward.3} parent=0 // pred_check
    _
  $region7: #{forward.3} parent=0 // pred_check_branch
    %16 = sbr.rel (0) target = $region9
  $region8: #{forward.3} parent=0 // pred_region
    _
  $region9: #{forward.3} parent=0 // pred_fallthru
    _
  // Predicated region
  $region10: #{forward.3} parent=0 // pred_check
    _
  $region11: #{forward.3} parent=0 // pred_check_branch
    %18 = sbr.rel (0) target = $region13
  $region12: #{forward.3} parent=0 // pred_region
    _
  $region13: #{forward.3} parent=0 // pred_fallthru
    _
  // Predicated region
  $region14: #{forward.3} parent=0 // pred_check
    _
  $region15: #{forward.3} parent=0 // pred_check_branch
    %20 = sbr.rel (0) target = $region17
  $region16: #{forward.3} parent=0 // pred_region
    _
  $region17: #{forward.3} parent=0 // pred_fallthru
    _
  // Predicated region
  $region18: #{forward.3} parent=0 // pred_check
    _
  $region19: #{forward.3} parent=0 // pred_check_branch
    %22 = sbr.rel (0) target = $region21
  $region20: #{forward.3} parent=0 // pred_region
    _
  $region21: #{forward.3} parent=0 // pred_fallthru
    _
  // Predicated region
  $region22: #{forward.3} parent=0 // pred_check
    _
  $region23: #{forward.3} parent=0 // pred_check_branch
    %24 = sbr.rel (0) target = $region25
  $region24: #{forward.3} parent=0 // pred_region
    _
  $region25: #{forward.3} parent=0 // pred_fallthru
    _
  // Predicated region
  $region26: #{forward.3} parent=0 // pred_check
    _
  $region27: #{forward.3} parent=0 // pred_check_branch
    %26 = sbr.rel (0) target = $region29
  $region28: #{forward.3} parent=0 // pred_region
    _
  $region29: #{forward.3} parent=0 // pred_fallthru
    _
  // Predicated region
  $region30: #{forward.3} parent=0 // pred_check
    _
  $region31: #{forward.3} parent=0 // pred_check_branch
    %28 = sbr.rel (0) target = $region33
  $region32: #{forward.3} parent=0 // pred_region
    _
  $region33: #{forward.3} parent=0 // pred_fallthru
    _
  %v30 = vld [vmem:[%s0] sm:$0xf]
  %v31 = vld [vmem:[%s0 + $0x4] sm:$0xf]
  %v32 = vld [vmem:[%s0 + $0x8] sm:$0xf]
  %v33 = vld [vmem:[%s0 + $0xc] sm:$0xf]
  %v34 = vld [vmem:[%s0 + $0x10] sm:$0xf]
  %v35 = vld [vmem:[%s0 + $0x14] sm:$0xf]
  %v36 = vld [vmem:[%s0 + $0x18] sm:$0xf]
  %v37 = vld [vmem:[%s0 + $0x1c] sm:$0xf]
  %v38 = vld [vmem:[%s0 + $0x20] sm:$0xf]
  %v39 = vld [vmem:[%s0 + $0x24] sm:$0xf]
  %v40 = vld [vmem:[%s0 + $0x28] sm:$0xf]
  %v41 = vld [vmem:[%s0 + $0x2c] sm:$0xf]
  %v42 = vld [vmem:[%s0 + $0x30] sm:$0xf]
  %v43 = vld [vmem:[%s0 + $0x34] sm:$0xf]
  %v44 = vld [vmem:[%s0 + $0x38] sm:$0xf]
  %v45 = vld [vmem:[%s0 + $0x3c] sm:$0xf]
  %v46 = vld [vmem:[%s1] sm:$0xf]
  %v47 = vld [vmem:[%s1 + $0x4] sm:$0xf]
  %v48 = vld [vmem:[%s1 + $0x8] sm:$0xf]
  %v49 = vld [vmem:[%s1 + $0xc] sm:$0xf]
  %v50 = vld [vmem:[%s1 + $0x10] sm:$0xf]
  %v51 = vld [vmem:[%s1 + $0x14] sm:$0xf]
  %v52 = vld [vmem:[%s1 + $0x18] sm:$0xf]
  %v53 = vld [vmem:[%s1 + $0x1c] sm:$0xf]
  %v54 = vld [vmem:[%s1 + $0x20] sm:$0xf]
  %v71 = vunpack.c.l.b16 %v30
  %v72 = vunpack.c.l.b16 %v31
  %v73 = vunpack.c.l.b16 %v32
  %v74 = vunpack.c.l.b16 %v33
  %v75 = vunpack.c.l.b16 %v34
  %v76 = vunpack.c.l.b16 %v35
  %v77 = vunpack.c.l.b16 %v36
  %v78 = vunpack.c.l.b16 %v37
  %v79 = vunpack.c.l.b16 %v38
  %v80 = vunpack.c.l.b16 %v39
  %v81 = vunpack.c.l.b16 %v40
  %v82 = vunpack.c.l.b16 %v41
  %v83 = vunpack.c.l.b16 %v42
  %v84 = vunpack.c.l.b16 %v43
  %v85 = vunpack.c.l.b16 %v44
  %v86 = vunpack.c.l.b16 %v45
  %v87 = vpack.c.b16 %v72, %v71
  %v88 = vpack.c.b16 %v74, %v73
  %v89 = vpack.c.b16 %v76, %v75
  %v90 = vpack.c.b16 %v78, %v77
  %v91 = vpack.c.b16 %v80, %v79
  %v92 = vpack.c.b16 %v82, %v81
  %v93 = vpack.c.b16 %v84, %v83
  %v94 = vpack.c.b16 %v86, %v85
  %v104 = vunpack.c.l.b16 %v46
  %v105 = vunpack.c.l.b16 %v47
  %v106 = vunpack.c.l.b16 %v48
  %v107 = vunpack.c.l.b16 %v49
  %v108 = vunpack.c.l.b16 %v50
  %v109 = vunpack.c.l.b16 %v51
  %v110 = vunpack.c.l.b16 %v52
  %v111 = vunpack.c.l.b16 %v53
  %v112 = vunpack.c.l.b16 %v54
  %v113 = vpack.c.b16 %v105, %v104
  %v114 = vpack.c.b16 %v107, %v106
  %v115 = vpack.c.b16 %v109, %v108
  %v116 = vpack.c.b16 %v111, %v110
  %v117 = vpack.c.b16 %v112, %v112
  %vm122 = vcmask 588800
  %v124 = vsel %vm122, %v87, 0
  %v127 = vsel %vm122, %v88, 0
  %v130 = vsel %vm122, %v89, 0
  %v133 = vsel %vm122, %v90, 0
  %v136 = vsel %vm122, %v91, 0
  %v139 = vsel %vm122, %v92, 0
  %v142 = vsel %vm122, %v93, 0
  %v145 = vsel %vm122, %v94, 0
  %vm147 = vcmask 1043456
  %v149 = vsel %vm147, %v117, 0
  %151 = vmatprep.subr.bf16.mxu0 0
  %152 = vmatpush1.bf16.msra.mxu0 %v113
  %153 = vmatprep.subr.bf16.mxu0 0
  %154 = vmatpush1.bf16.msra.mxu0 %v114
  %155 = vmatprep.subr.bf16.mxu0 0
  %156 = vmatpush1.bf16.msra.mxu0 %v115
  %157 = vmatprep.subr.bf16.mxu0 0
  %158 = vmatpush1.bf16.msra.mxu0 %v116
  %159 = vmatprep.subr.bf16.mxu0 0
  %160 = vmatpush1.bf16.msra.mxu0 %v149
  %161 = vmatprep.subr.bf16.mxu0 0
  %162 = vmatpush1.bf16.msra.mxu0 0
  %163 = vmatprep.subr.bf16.mxu0 0
  %164 = vmatpush1.bf16.msra.mxu0 0
  %165 = vmatprep.subr.bf16.mxu0 0
  %166 = vmatpush1.bf16.msra.mxu0 0
  %167 = vmatprep.subr.bf16.mxu0 0
  %168 = vmatpush1.bf16.msra.mxu0 0
  %169 = vmatprep.subr.bf16.mxu0 0
  %170 = vmatpush1.bf16.msra.mxu0 0
  %171 = vmatprep.subr.bf16.mxu0 0
  %172 = vmatpush1.bf16.msra.mxu0 0
  %173 = vmatprep.subr.bf16.mxu0 0
  %174 = vmatpush1.bf16.msra.mxu0 0
  %175 = vmatprep.subr.bf16.mxu0 0
  %176 = vmatpush1.bf16.msra.mxu0 0
  %177 = vmatprep.subr.bf16.mxu0 0
  %178 = vmatpush1.bf16.msra.mxu0 0
  %179 = vmatprep.subr.bf16.mxu0 0
  %180 = vmatpush1.bf16.msra.mxu0 0
  %181 = vmatprep.subr.bf16.mxu0 0
  %182 = vmatpush1.bf16.msra.mxu0 0
  %183 = vmatprep.mubr.bf16.mxu0 0
  %184 = vmatmul.mubr.bf16.gmra.mrb[0].mxu0 %v124
  %v185 = vpop.f32.mrb[0].mxu0
  %v186 = vadd.f32 0.0, %v185
  %v187 = vpop.f32.mrb[0].mxu0
  %v188 = vpop.f32.mrb[0].mxu0
  %v189 = vadd.f32 0.0, %v188
  %v190 = vpop.f32.mrb[0].mxu0
  %191 = vmatprep.mubr.bf16.mxu0 0
  %192 = vmatmul.mubr.bf16.gmra.mrb[0].mxu0 %v127
  %v193 = vpop.f32.mrb[0].mxu0
  %v194 = vadd.f32 0.0, %v193
  %v195 = vpop.f32.mrb[0].mxu0
  %v196 = vpop.f32.mrb[0].mxu0
  %v197 = vadd.f32 0.0, %v196
  %v198 = vpop.f32.mrb[0].mxu0
  %199 = vmatprep.mubr.bf16.mxu0 0
  %200 = vmatmul.mubr.bf16.gmra.mrb[0].mxu0 %v130
  %v201 = vpop.f32.mrb[0].mxu0
  %v202 = vadd.f32 0.0, %v201
  %v203 = vpop.f32.mrb[0].mxu0
  %v204 = vpop.f32.mrb[0].mxu0
  %v205 = vadd.f32 0.0, %v204
  %v206 = vpop.f32.mrb[0].mxu0
  %207 = vmatprep.mubr.bf16.mxu0 0
  %208 = vmatmul.mubr.bf16.gmra.mrb[0].mxu0 %v133
  %v209 = vpop.f32.mrb[0].mxu0
  %v210 = vadd.f32 0.0, %v209
  %v211 = vpop.f32.mrb[0].mxu0
  %v212 = vpop.f32.mrb[0].mxu0
  %v213 = vadd.f32 0.0, %v212
  %v214 = vpop.f32.mrb[0].mxu0
  %215 = vmatprep.mubr.bf16.mxu0 0
  %216 = vmatmul.mubr.bf16.gmra.mrb[0].mxu0 %v136
  %v217 = vpop.f32.mrb[0].mxu0
  %v218 = vadd.f32 0.0, %v217
  %v219 = vpop.f32.mrb[0].mxu0
  %v220 = vpop.f32.mrb[0].mxu0
  %v221 = vadd.f32 0.0, %v220
  %v222 = vpop.f32.mrb[0].mxu0
  %223 = vmatprep.mubr.bf16.mxu0 0
  %224 = vmatmul.mubr.bf16.gmra.mrb[0].mxu0 %v139
  %v225 = vpop.f32.mrb[0].mxu0
  %v226 = vadd.f32 0.0, %v225
  %v227 = vpop.f32.mrb[0].mxu0
  %v228 = vpop.f32.mrb[0].mxu0
  %v229 = vadd.f32 0.0, %v228
  %v230 = vpop.f32.mrb[0].mxu0
  %231 = vmatprep.mubr.bf16.mxu0 0
  %232 = vmatmul.mubr.bf16.gmra.mrb[0].mxu0 %v142
  %v233 = vpop.f32.mrb[0].mxu0
  %v234 = vadd.f32 0.0, %v233
  %v235 = vpop.f32.mrb[0].mxu0
  %v236 = vpop.f32.mrb[0].mxu0
  %v237 = vadd.f32 0.0, %v236
  %v238 = vpop.f32.mrb[0].mxu0
  %239 = vmatprep.mubr.bf16.mxu0 0
  %240 = vmatmul.mubr.bf16.gmra.mrb[0].mxu0 %v145
  %v241 = vpop.f32.mrb[0].mxu0
  %v242 = vadd.f32 0.0, %v241
  %v243 = vpop.f32.mrb[0].mxu0
  %v244 = vpop.f32.mrb[0].mxu0
  %v245 = vadd.f32 0.0, %v244
  %v246 = vpop.f32.mrb[0].mxu0
  %247 = vdwg.mxu0
  %v248 = vld [vmem:[%s2] sm:$0x1]
  %v250 = vlaneseq
  %v251 = vshrl.u32 %v250, 7
  %v252 = vsub.s32 0, %v251
  %v253 = vrot.slane %v248, %v252
  %v255 = vmul.f32 %v186, %v253
  %v256 = vmul.f32 %v189, %v253
  %v257 = vmul.f32 %v194, %v253
  %v258 = vmul.f32 %v197, %v253
  %v259 = vmul.f32 %v202, %v253
  %v260 = vmul.f32 %v205, %v253
  %v261 = vmul.f32 %v210, %v253
  %v262 = vmul.f32 %v213, %v253
  %v263 = vmul.f32 %v218, %v253
  %v264 = vmul.f32 %v221, %v253
  %v265 = vmul.f32 %v226, %v253
  %v266 = vmul.f32 %v229, %v253
  %v267 = vmul.f32 %v234, %v253
  %v268 = vmul.f32 %v237, %v253
  %v269 = vmul.f32 %v242, %v253
  %v270 = vmul.f32 %v245, %v253
  %v271 = vld [vmem:[%s3] sm:$0x1]
  %v273 = vlaneseq
  %v274 = vshrl.u32 %v273, 7
  %v275 = vsub.s32 0, %v274
  %v276 = vrot.slane %v271, %v275
  %v278 = vadd.f32 %v255, %v276
  %v279 = vadd.f32 %v256, %v276
  %v280 = vadd.f32 %v257, %v276
  %v281 = vadd.f32 %v258, %v276
  %v282 = vadd.f32 %v259, %v276
  %v283 = vadd.f32 %v260, %v276
  %v284 = vadd.f32 %v261, %v276
  %v285 = vadd.f32 %v262, %v276
  %v286 = vadd.f32 %v263, %v276
  %v287 = vadd.f32 %v264, %v276
  %v288 = vadd.f32 %v265, %v276
  %v289 = vadd.f32 %v266, %v276
  %v290 = vadd.f32 %v267, %v276
  %v291 = vadd.f32 %v268, %v276
  %v292 = vadd.f32 %v269, %v276
  %v293 = vadd.f32 %v270, %v276
  %v294 = vld [vmem:[%s4] sm:$0xf]
  %v295 = vld [vmem:[%s4 + $0x4] sm:$0xf]
  %v296 = vld [vmem:[%s4 + $0x8] sm:$0xf]
  %v297 = vld [vmem:[%s4 + $0xc] sm:$0xf]
  %v298 = vld [vmem:[%s4 + $0x10] sm:$0xf]
  %v299 = vld [vmem:[%s4 + $0x14] sm:$0xf]
  %v300 = vld [vmem:[%s4 + $0x18] sm:$0xf]
  %v301 = vld [vmem:[%s4 + $0x1c] sm:$0xf]
  %v302 = vld [vmem:[%s4 + $0x20] sm:$0xf]
  %v303 = vld [vmem:[%s4 + $0x24] sm:$0xf]
  %v304 = vld [vmem:[%s4 + $0x28] sm:$0xf]
  %v305 = vld [vmem:[%s4 + $0x2c] sm:$0xf]
  %v306 = vld [vmem:[%s4 + $0x30] sm:$0xf]
  %v307 = vld [vmem:[%s4 + $0x34] sm:$0xf]
  %v308 = vld [vmem:[%s4 + $0x38] sm:$0xf]
  %v309 = vld [vmem:[%s4 + $0x3c] sm:$0xf]
  %v310 = vld [vmem:[%s5] sm:$0x3]
  %v327 = vunpack.c.l.b16 %v294
  %v328 = vunpack.c.l.b16 %v295
  %v329 = vunpack.c.l.b16 %v296
  %v330 = vunpack.c.l.b16 %v297
  %v331 = vunpack.c.l.b16 %v298
  %v332 = vunpack.c.l.b16 %v299
  %v333 = vunpack.c.l.b16 %v300
  %v334 = vunpack.c.l.b16 %v301
  %v335 = vunpack.c.l.b16 %v302
  %v336 = vunpack.c.l.b16 %v303
  %v337 = vunpack.c.l.b16 %v304
  %v338 = vunpack.c.l.b16 %v305
  %v339 = vunpack.c.l.b16 %v306
  %v340 = vunpack.c.l.b16 %v307
  %v341 = vunpack.c.l.b16 %v308
  %v342 = vunpack.c.l.b16 %v309
  %v343 = vpack.c.b16 %v328, %v327
  %v344 = vpack.c.b16 %v330, %v329
  %v345 = vpack.c.b16 %v332, %v331
  %v346 = vpack.c.b16 %v334, %v333
  %v347 = vpack.c.b16 %v336, %v335
  %v348 = vpack.c.b16 %v338, %v337
  %v349 = vpack.c.b16 %v340, %v339
  %v350 = vpack.c.b16 %v342, %v341
  %vm351 = vcmask 31744
  %v353 = vsel %vm351, %v343, 0
  %v356 = vsel %vm351, %v344, 0
  %v359 = vsel %vm351, %v345, 0
  %v362 = vsel %vm351, %v346, 0
  %v365 = vsel %vm351, %v347, 0
  %v368 = vsel %vm351, %v348, 0
  %v371 = vsel %vm351, %v349, 0
  %v374 = vsel %vm351, %v350, 0
  %vm376 = vcmask 1041408
  %v378 = vsel %vm376, %v310, 0
  %380 = vmatprep.subr.bf16.mxu0 0
  %381 = vmatpush1.bf16.msra.mxu0 %v378
  %382 = vmatprep.subr.bf16.mxu0 0
  %383 = vmatpush1.bf16.msra.mxu0 0
  %384 = vmatprep.subr.bf16.mxu0 0
  %385 = vmatpush1.bf16.msra.mxu0 0
  %386 = vmatprep.subr.bf16.mxu0 0
  %387 = vmatpush1.bf16.msra.mxu0 0
  %388 = vmatprep.subr.bf16.mxu0 0
  %389 = vmatpush1.bf16.msra.mxu0 0
  %390 = vmatprep.subr.bf16.mxu0 0
  %391 = vmatpush1.bf16.msra.mxu0 0
  %392 = vmatprep.subr.bf16.mxu0 0
  %393 = vmatpush1.bf16.msra.mxu0 0
  %394 = vmatprep.subr.bf16.mxu0 0
  %395 = vmatpush1.bf16.msra.mxu0 0
  %396 = vmatprep.subr.bf16.mxu0 0
  %397 = vmatpush1.bf16.msra.mxu0 0
  %398 = vmatprep.subr.bf16.mxu0 0
  %399 = vmatpush1.bf16.msra.mxu0 0
  %400 = vmatprep.subr.bf16.mxu0 0
  %401 = vmatpush1.bf16.msra.mxu0 0
  %402 = vmatprep.subr.bf16.mxu0 0
  %403 = vmatpush1.bf16.msra.mxu0 0
  %404 = vmatprep.subr.bf16.mxu0 0
  %405 = vmatpush1.bf16.msra.mxu0 0
  %406 = vmatprep.subr.bf16.mxu0 0
  %407 = vmatpush1.bf16.msra.mxu0 0
  %408 = vmatprep.subr.bf16.mxu0 0
  %409 = vmatpush1.bf16.msra.mxu0 0
  %410 = vmatprep.subr.bf16.mxu0 0
  %411 = vmatpush1.bf16.msra.mxu0 0
  %412 = vmatprep.mubr.bf16.mxu0 0
  %413 = vmatmul.mubr.bf16.gmra.mrb[0].mxu0 %v353
  %v414 = vpop.f32.mrb[0].mxu0
  %v415 = vadd.f32 0.0, %v414
  %v416 = vpop.f32.mrb[0].mxu0
  %v417 = vpop.f32.mrb[0].mxu0
  %v418 = vadd.f32 0.0, %v417
  %v419 = vpop.f32.mrb[0].mxu0
  %420 = vmatprep.mubr.bf16.mxu0 0
  %421 = vmatmul.mubr.bf16.gmra.mrb[0].mxu0 %v356
  %v422 = vpop.f32.mrb[0].mxu0
  %v423 = vadd.f32 0.0, %v422
  %v424 = vpop.f32.mrb[0].mxu0
  %v425 = vpop.f32.mrb[0].mxu0
  %v426 = vadd.f32 0.0, %v425
  %v427 = vpop.f32.mrb[0].mxu0
  %428 = vmatprep.mubr.bf16.mxu0 0
  %429 = vmatmul.mubr.bf16.gmra.mrb[0].mxu0 %v359
  %v430 = vpop.f32.mrb[0].mxu0
  %v431 = vadd.f32 0.0, %v430
  %v432 = vpop.f32.mrb[0].mxu0
  %v433 = vpop.f32.mrb[0].mxu0
  %v434 = vadd.f32 0.0, %v433
  %v435 = vpop.f32.mrb[0].mxu0
  %436 = vmatprep.mubr.bf16.mxu0 0
  %437 = vmatmul.mubr.bf16.gmra.mrb[0].mxu0 %v362
  %v438 = vpop.f32.mrb[0].mxu0
  %v439 = vadd.f32 0.0, %v438
  %v440 = vpop.f32.mrb[0].mxu0
  %v441 = vpop.f32.mrb[0].mxu0
  %v442 = vadd.f32 0.0, %v441
  %v443 = vpop.f32.mrb[0].mxu0
  %444 = vmatprep.mubr.bf16.mxu0 0
  %445 = vmatmul.mubr.bf16.gmra.mrb[0].mxu0 %v365
  %v446 = vpop.f32.mrb[0].mxu0
  %v447 = vadd.f32 0.0, %v446
  %v448 = vpop.f32.mrb[0].mxu0
  %v449 = vpop.f32.mrb[0].mxu0
  %v450 = vadd.f32 0.0, %v449
  %v451 = vpop.f32.mrb[0].mxu0
  %452 = vmatprep.mubr.bf16.mxu0 0
  %453 = vmatmul.mubr.bf16.gmra.mrb[0].mxu0 %v368
  %v454 = vpop.f32.mrb[0].mxu0
  %v455 = vadd.f32 0.0, %v454
  %v456 = vpop.f32.mrb[0].mxu0
  %v457 = vpop.f32.mrb[0].mxu0
  %v458 = vadd.f32 0.0, %v457
  %v459 = vpop.f32.mrb[0].mxu0
  %460 = vmatprep.mubr.bf16.mxu0 0
  %461 = vmatmul.mubr.bf16.gmra.mrb[0].mxu0 %v371
  %v462 = vpop.f32.mrb[0].mxu0
  %v463 = vadd.f32 0.0, %v462
  %v464 = vpop.f32.mrb[0].mxu0
  %v465 = vpop.f32.mrb[0].mxu0
  %v466 = vadd.f32 0.0, %v465
  %v467 = vpop.f32.mrb[0].mxu0
  %468 = vmatprep.mubr.bf16.mxu0 0
  %469 = vmatmul.mubr.bf16.gmra.mrb[0].mxu0 %v374
  %v470 = vpop.f32.mrb[0].mxu0
  %v471 = vadd.f32 0.0, %v470
  %v472 = vpop.f32.mrb[0].mxu0
  %v473 = vpop.f32.mrb[0].mxu0
  %v474 = vadd.f32 0.0, %v473
  %v475 = vpop.f32.mrb[0].mxu0
  %476 = vdwg.mxu0
  %v477 = vld [vmem:[%s6] sm:$0x1]
  %v479 = vlaneseq
  %v480 = vshrl.u32 %v479, 7
  %v481 = vsub.s32 0, %v480
  %v482 = vrot.slane %v477, %v481
  %v484 = vmul.f32 %v415, %v482
  %v485 = vmul.f32 %v418, %v482
  %v486 = vmul.f32 %v423, %v482
  %v487 = vmul.f32 %v426, %v482
  %v488 = vmul.f32 %v431, %v482
  %v489 = vmul.f32 %v434, %v482
  %v490 = vmul.f32 %v439, %v482
  %v491 = vmul.f32 %v442, %v482
  %v492 = vmul.f32 %v447, %v482
  %v493 = vmul.f32 %v450, %v482
  %v494 = vmul.f32 %v455, %v482
  %v495 = vmul.f32 %v458, %v482
  %v496 = vmul.f32 %v463, %v482
  %v497 = vmul.f32 %v466, %v482
  %v498 = vmul.f32 %v471, %v482
  %v499 = vmul.f32 %v474, %v482
  %v500 = vld [vmem:[%s7] sm:$0x1]
  %v502 = vlaneseq
  %v503 = vshrl.u32 %v502, 7
  %v504 = vsub.s32 0, %v503
  %v505 = vrot.slane %v500, %v504
  %v507 = vadd.f32 %v484, %v505
  %v508 = vadd.f32 %v485, %v505
  %v509 = vadd.f32 %v486, %v505
  %v510 = vadd.f32 %v487, %v505
  %v511 = vadd.f32 %v488, %v505
  %v512 = vadd.f32 %v489, %v505
  %v513 = vadd.f32 %v490, %v505
  %v514 = vadd.f32 %v491, %v505
  %v515 = vadd.f32 %v492, %v505
  %v516 = vadd.f32 %v493, %v505
  %v517 = vadd.f32 %v494, %v505
  %v518 = vadd.f32 %v495, %v505
  %v519 = vadd.f32 %v496, %v505
  %v520 = vadd.f32 %v497, %v505
  %v521 = vadd.f32 %v498, %v505
  %v522 = vadd.f32 %v499, %v505
  %v523 = vadd.f32 %v278, %v507
  %v524 = vadd.f32 %v279, %v508
  %v525 = vadd.f32 %v280, %v509
  %v526 = vadd.f32 %v281, %v510
  %v527 = vadd.f32 %v282, %v511
  %v528 = vadd.f32 %v283, %v512
  %v529 = vadd.f32 %v284, %v513
  %v530 = vadd.f32 %v285, %v514
  %v531 = vadd.f32 %v286, %v515
  %v532 = vadd.f32 %v287, %v516
  %v533 = vadd.f32 %v288, %v517
  %v534 = vadd.f32 %v289, %v518
  %v535 = vadd.f32 %v290, %v519
  %v536 = vadd.f32 %v291, %v520
  %v537 = vadd.f32 %v292, %v521
  %v538 = vadd.f32 %v293, %v522
  %v539 = vmax.f32 %v523, 0.0
  %v540 = vmax.f32 %v524, 0.0
  %v541 = vmax.f32 %v525, 0.0
  %v542 = vmax.f32 %v526, 0.0
  %v543 = vmax.f32 %v527, 0.0
  %v544 = vmax.f32 %v528, 0.0
  %v545 = vmax.f32 %v529, 0.0
  %v546 = vmax.f32 %v530, 0.0
  %v547 = vmax.f32 %v531, 0.0
  %v548 = vmax.f32 %v532, 0.0
  %v549 = vmax.f32 %v533, 0.0
  %v550 = vmax.f32 %v534, 0.0
  %v551 = vmax.f32 %v535, 0.0
  %v552 = vmax.f32 %v536, 0.0
  %v553 = vmax.f32 %v537, 0.0
  %v554 = vmax.f32 %v538, 0.0
  %555 = vst [vmem:[%s8] sm:$0xff] %v539
  %556 = vst [vmem:[%s8 + $0x8] sm:$0xff] %v540
  %557 = vst [vmem:[%s8 + $0x10] sm:$0xff] %v541
  %558 = vst [vmem:[%s8 + $0x18] sm:$0xff] %v542
  %559 = vst [vmem:[%s8 + $0x20] sm:$0xff] %v543
  %560 = vst [vmem:[%s8 + $0x28] sm:$0xff] %v544
  %561 = vst [vmem:[%s8 + $0x30] sm:$0xff] %v545
  %562 = vst [vmem:[%s8 + $0x38] sm:$0xff] %v546
  %563 = vst [vmem:[%s8 + $0x40] sm:$0xff] %v547
  %564 = vst [vmem:[%s8 + $0x48] sm:$0xff] %v548
  %565 = vst [vmem:[%s8 + $0x50] sm:$0xff] %v549
  %566 = vst [vmem:[%s8 + $0x58] sm:$0xff] %v550
  %567 = vst [vmem:[%s8 + $0x60] sm:$0xff] %v551
  %568 = vst [vmem:[%s8 + $0x68] sm:$0xff] %v552
  %569 = vst [vmem:[%s8 + $0x70] sm:$0xff] %v553
  %570 = vst [vmem:[%s8 + $0x78] sm:$0xff] %v554
  // Predicated region
  $region34: #{forward.3} parent=0 // pred_check
    _
  $region35: #{forward.3} parent=0 // pred_check_branch
    %572 = sbr.rel (0) target = $region37
  $region36: #{forward.3} parent=0 // pred_region
    _
  $region37: #{forward.3} parent=0 // pred_fallthru
    _
  // Predicated region
  $region38: #{forward.3} parent=0 // pred_check
    _
  $region39: #{forward.3} parent=0 // pred_check_branch
    %574 = sbr.rel (0) target = $region41
  $region40: #{forward.3} parent=0 // pred_region
    _
  $region41: #{forward.3} parent=0 // pred_fallthru
    _

// kernel: forward.2
$region0: #{forward.2}
  #allocation0 [shape = 'u32[]', space=smem, size = 0x4, offset = 0x4, fixed_abs, tag = 'smem constant byte address 0x4 - core index']
  #allocation1 [shape = 'u32[144,128]{1,0:T(1,128)}', space=vmem, size = 0x12000, scoped, tag = 'internal scratch']
  %s0 = inlined_call_operand.vmem [shape: bf16[128,36], index: 0, kind: input, shape index: {}]
  %s1 = inlined_call_operand.vmem [shape: bf16[36,128], index: 1, kind: input, shape index: {}]
  %s2 = inlined_call_operand.vmem [shape: f32[1,128], index: 2, kind: input, shape index: {}]
  %s3 = inlined_call_operand.vmem [shape: f32[1,128], index: 3, kind: input, shape index: {}]
  %s4 = inlined_call_operand.vmem [shape: bf16[128,128], index: 4, kind: output, shape index: {}]
  %s5 = sld [smem:[#allocation0]]
  $region26: #{forward.2} parent=0
    _
  %s7 = ssub.s32 1, %s5
  %s8 = scalar_select 0, %s7, %s5
  // Predicated region
  $region2: #{forward.2} parent=0 // pred_check
    _
  $region3: #{forward.2} parent=0 // pred_check_branch
    %10 = sbr.rel (0) target = $region5
  $region4: #{forward.2} parent=0 // pred_region
    _
  $region5: #{forward.2} parent=0 // pred_fallthru
    _
  // Predicated region
  $region6: #{forward.2} parent=0 // pred_check
    _
  $region7: #{forward.2} parent=0 // pred_check_branch
    %12 = sbr.rel (0) target = $region9
  $region8: #{forward.2} parent=0 // pred_region
    _
  $region9: #{forward.2} parent=0 // pred_fallthru
    _
  // Predicated region
  $region10: #{forward.2} parent=0 // pred_check
    _
  $region11: #{forward.2} parent=0 // pred_check_branch
    %14 = sbr.rel (0) target = $region13
  $region12: #{forward.2} parent=0 // pred_region
    _
  $region13: #{forward.2} parent=0 // pred_fallthru
    _
  // Predicated region
  $region14: #{forward.2} parent=0 // pred_check
    _
  $region15: #{forward.2} parent=0 // pred_check_branch
    %16 = sbr.rel (0) target = $region17
  $region16: #{forward.2} parent=0 // pred_region
    _
  $region17: #{forward.2} parent=0 // pred_fallthru
    _
  %v18 = vld [vmem:[%s0] sm:$0xf]
  %v19 = vld [vmem:[%s0 + $0x4] sm:$0xf]
  %v20 = vld [vmem:[%s0 + $0x8] sm:$0xf]
  %v21 = vld [vmem:[%s0 + $0xc] sm:$0xf]
  %v22 = vld [vmem:[%s0 + $0x10] sm:$0xf]
  %v23 = vld [vmem:[%s0 + $0x14] sm:$0xf]
  %v24 = vld [vmem:[%s0 + $0x18] sm:$0xf]
  %v25 = vld [vmem:[%s0 + $0x1c] sm:$0xf]
  %v26 = vld [vmem:[%s0 + $0x20] sm:$0xf]
  %v27 = vld [vmem:[%s0 + $0x24] sm:$0xf]
  %v28 = vld [vmem:[%s0 + $0x28] sm:$0xf]
  %v29 = vld [vmem:[%s0 + $0x2c] sm:$0xf]
  %v30 = vld [vmem:[%s0 + $0x30] sm:$0xf]
  %v31 = vld [vmem:[%s0 + $0x34] sm:$0xf]
  %v32 = vld [vmem:[%s0 + $0x38] sm:$0xf]
  %v33 = vld [vmem:[%s0 + $0x3c] sm:$0xf]
  %v34 = vld [vmem:[%s1] sm:$0xf]
  %v35 = vld [vmem:[%s1 + $0x4] sm:$0xf]
  %v36 = vld [vmem:[%s1 + $0x8] sm:$0xf]
  %v37 = vld [vmem:[%s1 + $0xc] sm:$0xf]
  %v38 = vld [vmem:[%s1 + $0x10] sm:$0x3]
  %v55 = vunpack.c.l.b16 %v18
  %v56 = vunpack.c.l.b16 %v19
  %v57 = vunpack.c.l.b16 %v20
  %v58 = vunpack.c.l.b16 %v21
  %v59 = vunpack.c.l.b16 %v22
  %v60 = vunpack.c.l.b16 %v23
  %v61 = vunpack.c.l.b16 %v24
  %v62 = vunpack.c.l.b16 %v25
  %v63 = vunpack.c.l.b16 %v26
  %v64 = vunpack.c.l.b16 %v27
  %v65 = vunpack.c.l.b16 %v28
  %v66 = vunpack.c.l.b16 %v29
  %v67 = vunpack.c.l.b16 %v30
  %v68 = vunpack.c.l.b16 %v31
  %v69 = vunpack.c.l.b16 %v32
  %v70 = vunpack.c.l.b16 %v33
  %v71 = vpack.c.b16 %v56, %v55
  %v72 = vpack.c.b16 %v58, %v57
  %v73 = vpack.c.b16 %v60, %v59
  %v74 = vpack.c.b16 %v62, %v61
  %v75 = vpack.c.b16 %v64, %v63
  %v76 = vpack.c.b16 %v66, %v65
  %v77 = vpack.c.b16 %v68, %v67
  %v78 = vpack.c.b16 %v70, %v69
  %v84 = vunpack.c.l.b16 %v34
  %v85 = vunpack.c.l.b16 %v35
  %v86 = vunpack.c.l.b16 %v36
  %v87 = vunpack.c.l.b16 %v37
  %v88 = vunpack.c.l.b16 %v38
  %v89 = vpack.c.b16 %v85, %v84
  %v90 = vpack.c.b16 %v87, %v86
  %v91 = vpack.c.b16 %v88, %v88
  %vm94 = vcmask 293888
  %v96 = vsel %vm94, %v71, 0
  %v99 = vsel %vm94, %v72, 0
  %v102 = vsel %vm94, %v73, 0
  %v105 = vsel %vm94, %v74, 0
  %v108 = vsel %vm94, %v75, 0
  %v111 = vsel %vm94, %v76, 0
  %v114 = vsel %vm94, %v77, 0
  %v117 = vsel %vm94, %v78, 0
  %vm119 = vcmask 1041408
  %v121 = vsel %vm119, %v91, 0
  %123 = vmatprep.subr.bf16.mxu0 0
  %124 = vmatpush1.bf16.msra.mxu0 %v89
  %125 = vmatprep.subr.bf16.mxu0 0
  %126 = vmatpush1.bf16.msra.mxu0 %v90
  %127 = vmatprep.subr.bf16.mxu0 0
  %128 = vmatpush1.bf16.msra.mxu0 %v121
  %129 = vmatprep.subr.bf16.mxu0 0
  %130 = vmatpush1.bf16.msra.mxu0 0
  %131 = vmatprep.subr.bf16.mxu0 0
  %132 = vmatpush1.bf16.msra.mxu0 0
  %133 = vmatprep.subr.bf16.mxu0 0
  %134 = vmatpush1.bf16.msra.mxu0 0
  %135 = vmatprep.subr.bf16.mxu0 0
  %136 = vmatpush1.bf16.msra.mxu0 0
  %137 = vmatprep.subr.bf16.mxu0 0
  %138 = vmatpush1.bf16.msra.mxu0 0
  %139 = vmatprep.subr.bf16.mxu0 0
  %140 = vmatpush1.bf16.msra.mxu0 0
  %141 = vmatprep.subr.bf16.mxu0 0
  %142 = vmatpush1.bf16.msra.mxu0 0
  %143 = vmatprep.subr.bf16.mxu0 0
  %144 = vmatpush1.bf16.msra.mxu0 0
  %145 = vmatprep.subr.bf16.mxu0 0
  %146 = vmatpush1.bf16.msra.mxu0 0
  %147 = vmatprep.subr.bf16.mxu0 0
  %148 = vmatpush1.bf16.msra.mxu0 0
  %149 = vmatprep.subr.bf16.mxu0 0
  %150 = vmatpush1.bf16.msra.mxu0 0
  %151 = vmatprep.subr.bf16.mxu0 0
  %152 = vmatpush1.bf16.msra.mxu0 0
  %153 = vmatprep.subr.bf16.mxu0 0
  %154 = vmatpush1.bf16.msra.mxu0 0
  %155 = vmatprep.mubr.bf16.mxu0 0
  %156 = vmatmul.mubr.bf16.gmra.mrb[0].mxu0 %v96
  %v157 = vpop.f32.mrb[0].mxu0
  %v158 = vadd.f32 0.0, %v157
  %v159 = vpop.f32.mrb[0].mxu0
  %v160 = vpop.f32.mrb[0].mxu0
  %v161 = vadd.f32 0.0, %v160
  %v162 = vpop.f32.mrb[0].mxu0
  %163 = vmatprep.mubr.bf16.mxu0 0
  %164 = vmatmul.mubr.bf16.gmra.mrb[0].mxu0 %v99
  %v165 = vpop.f32.mrb[0].mxu0
  %v166 = vadd.f32 0.0, %v165
  %v167 = vpop.f32.mrb[0].mxu0
  %v168 = vpop.f32.mrb[0].mxu0
  %v169 = vadd.f32 0.0, %v168
  %v170 = vpop.f32.mrb[0].mxu0
  %171 = vmatprep.mubr.bf16.mxu0 0
  %172 = vmatmul.mubr.bf16.gmra.mrb[0].mxu0 %v102
  %v173 = vpop.f32.mrb[0].mxu0
  %v174 = vadd.f32 0.0, %v173
  %v175 = vpop.f32.mrb[0].mxu0
  %v176 = vpop.f32.mrb[0].mxu0
  %v177 = vadd.f32 0.0, %v176
  %v178 = vpop.f32.mrb[0].mxu0
  %179 = vmatprep.mubr.bf16.mxu0 0
  %180 = vmatmul.mubr.bf16.gmra.mrb[0].mxu0 %v105
  %v181 = vpop.f32.mrb[0].mxu0
  %v182 = vadd.f32 0.0, %v181
  %v183 = vpop.f32.mrb[0].mxu0
  %v184 = vpop.f32.mrb[0].mxu0
  %v185 = vadd.f32 0.0, %v184
  %v186 = vpop.f32.mrb[0].mxu0
  %187 = vmatprep.mubr.bf16.mxu0 0
  %188 = vmatmul.mubr.bf16.gmra.mrb[0].mxu0 %v108
  %v189 = vpop.f32.mrb[0].mxu0
  %v190 = vadd.f32 0.0, %v189
  %v191 = vpop.f32.mrb[0].mxu0
  %v192 = vpop.f32.mrb[0].mxu0
  %v193 = vadd.f32 0.0, %v192
  %v194 = vpop.f32.mrb[0].mxu0
  %195 = vmatprep.mubr.bf16.mxu0 0
  %196 = vmatmul.mubr.bf16.gmra.mrb[0].mxu0 %v111
  %v197 = vpop.f32.mrb[0].mxu0
  %v198 = vadd.f32 0.0, %v197
  %v199 = vpop.f32.mrb[0].mxu0
  %v200 = vpop.f32.mrb[0].mxu0
  %v201 = vadd.f32 0.0, %v200
  %v202 = vpop.f32.mrb[0].mxu0
  %203 = vmatprep.mubr.bf16.mxu0 0
  %204 = vmatmul.mubr.bf16.gmra.mrb[0].mxu0 %v114
  %v205 = vpop.f32.mrb[0].mxu0
  %v206 = vadd.f32 0.0, %v205
  %v207 = vpop.f32.mrb[0].mxu0
  %v208 = vpop.f32.mrb[0].mxu0
  %v209 = vadd.f32 0.0, %v208
  %v210 = vpop.f32.mrb[0].mxu0
  %211 = vmatprep.mubr.bf16.mxu0 0
  %212 = vmatmul.mubr.bf16.gmra.mrb[0].mxu0 %v117
  %v213 = vpop.f32.mrb[0].mxu0
  %v214 = vadd.f32 0.0, %v213
  %v215 = vpop.f32.mrb[0].mxu0
  %v216 = vpop.f32.mrb[0].mxu0
  %v217 = vadd.f32 0.0, %v216
  %v218 = vpop.f32.mrb[0].mxu0
  %219 = vdwg.mxu0
  %v220 = vld [vmem:[%s2] sm:$0x1]
  %v222 = vlaneseq
  %v223 = vshrl.u32 %v222, 7
  %v224 = vsub.s32 0, %v223
  %v225 = vrot.slane %v220, %v224
  %v227 = vmul.f32 %v158, %v225
  %v228 = vmul.f32 %v161, %v225
  %v229 = vmul.f32 %v166, %v225
  %v230 = vmul.f32 %v169, %v225
  %v231 = vmul.f32 %v174, %v225
  %v232 = vmul.f32 %v177, %v225
  %v233 = vmul.f32 %v182, %v225
  %v234 = vmul.f32 %v185, %v225
  %v235 = vmul.f32 %v190, %v225
  %v236 = vmul.f32 %v193, %v225
  %v237 = vmul.f32 %v198, %v225
  %v238 = vmul.f32 %v201, %v225
  %v239 = vmul.f32 %v206, %v225
  %v240 = vmul.f32 %v209, %v225
  %v241 = vmul.f32 %v214, %v225
  %v242 = vmul.f32 %v217, %v225
  %v243 = vld [vmem:[%s3] sm:$0x1]
  %v245 = vlaneseq
  %v246 = vshrl.u32 %v245, 7
  %v247 = vsub.s32 0, %v246
  %v248 = vrot.slane %v243, %v247
  %v250 = vadd.f32 %v227, %v248
  %v251 = vadd.f32 %v228, %v248
  %v252 = vadd.f32 %v229, %v248
  %v253 = vadd.f32 %v230, %v248
  %v254 = vadd.f32 %v231, %v248
  %v255 = vadd.f32 %v232, %v248
  %v256 = vadd.f32 %v233, %v248
  %v257 = vadd.f32 %v234, %v248
  %v258 = vadd.f32 %v235, %v248
  %v259 = vadd.f32 %v236, %v248
  %v260 = vadd.f32 %v237, %v248
  %v261 = vadd.f32 %v238, %v248
  %v262 = vadd.f32 %v239, %v248
  %v263 = vadd.f32 %v240, %v248
  %v264 = vadd.f32 %v241, %v248
  %v265 = vadd.f32 %v242, %v248
  %v266 = vmax.f32 %v250, 0.0
  %v267 = vmax.f32 %v251, 0.0
  %v268 = vmax.f32 %v252, 0.0
  %v269 = vmax.f32 %v253, 0.0
  %v270 = vmax.f32 %v254, 0.0
  %v271 = vmax.f32 %v255, 0.0
  %v272 = vmax.f32 %v256, 0.0
  %v273 = vmax.f32 %v257, 0.0
  %v274 = vmax.f32 %v258, 0.0
  %v275 = vmax.f32 %v259, 0.0
  %v276 = vmax.f32 %v260, 0.0
  %v277 = vmax.f32 %v261, 0.0
  %v278 = vmax.f32 %v262, 0.0
  %v279 = vmax.f32 %v263, 0.0
  %v280 = vmax.f32 %v264, 0.0
  %v281 = vmax.f32 %v265, 0.0
  %v282 = vpack.c.bf16 %v267, %v266
  %v283 = vpack.c.bf16 %v269, %v268
  %v284 = vpack.c.bf16 %v271, %v270
  %v285 = vpack.c.bf16 %v273, %v272
  %v286 = vpack.c.bf16 %v275, %v274
  %v287 = vpack.c.bf16 %v277, %v276
  %v288 = vpack.c.bf16 %v279, %v278
  %v289 = vpack.c.bf16 %v281, %v280
  %v298 = vunpack.c.l.b16 %v282
  %v299 = vunpack.c.h.b16 %v282
  %v300 = vunpack.c.l.b16 %v283
  %v301 = vunpack.c.h.b16 %v283
  %v302 = vunpack.c.l.b16 %v284
  %v303 = vunpack.c.h.b16 %v284
  %v304 = vunpack.c.l.b16 %v285
  %v305 = vunpack.c.h.b16 %v285
  %v306 = vunpack.c.l.b16 %v286
  %v307 = vunpack.c.h.b16 %v286
  %v308 = vunpack.c.l.b16 %v287
  %v309 = vunpack.c.h.b16 %v287
  %v310 = vunpack.c.l.b16 %v288
  %v311 = vunpack.c.h.b16 %v288
  %v312 = vunpack.c.l.b16 %v289
  %v313 = vunpack.c.h.b16 %v289
  %v314 = vpack.c.b16 %v298, %v298
  %v315 = vpack.c.b16 %v299, %v299
  %v316 = vpack.c.b16 %v300, %v300
  %v317 = vpack.c.b16 %v301, %v301
  %v318 = vpack.c.b16 %v302, %v302
  %v319 = vpack.c.b16 %v303, %v303
  %v320 = vpack.c.b16 %v304, %v304
  %v321 = vpack.c.b16 %v305, %v305
  %v322 = vpack.c.b16 %v306, %v306
  %v323 = vpack.c.b16 %v307, %v307
  %v324 = vpack.c.b16 %v308, %v308
  %v325 = vpack.c.b16 %v309, %v309
  %v326 = vpack.c.b16 %v310, %v310
  %v327 = vpack.c.b16 %v311, %v311
  %v328 = vpack.c.b16 %v312, %v312
  %v329 = vpack.c.b16 %v313, %v313
  %346 = vst [vmem:[%s4] sm:$0xf] %v314
  %347 = vst [vmem:[%s4 + $0x4] sm:$0xf] %v315
  %348 = vst [vmem:[%s4 + $0x8] sm:$0xf] %v316
  %349 = vst [vmem:[%s4 + $0xc] sm:$0xf] %v317
  %350 = vst [vmem:[%s4 + $0x10] sm:$0xf] %v318
  %351 = vst [vmem:[%s4 + $0x14] sm:$0xf] %v319
  %352 = vst [vmem:[%s4 + $0x18] sm:$0xf] %v320
  %353 = vst [vmem:[%s4 + $0x1c] sm:$0xf] %v321
  %354 = vst [vmem:[%s4 + $0x20] sm:$0xf] %v322
  %355 = vst [vmem:[%s4 + $0x24] sm:$0xf] %v323
  %356 = vst [vmem:[%s4 + $0x28] sm:$0xf] %v324
  %357 = vst [vmem:[%s4 + $0x2c] sm:$0xf] %v325
  %358 = vst [vmem:[%s4 + $0x30] sm:$0xf] %v326
  %359 = vst [vmem:[%s4 + $0x34] sm:$0xf] %v327
  %360 = vst [vmem:[%s4 + $0x38] sm:$0xf] %v328
  %361 = vst [vmem:[%s4 + $0x3c] sm:$0xf] %v329
  // Predicated region
  $region18: #{forward.2} parent=0 // pred_check
    _
  $region19: #{forward.2} parent=0 // pred_check_branch
    %363 = sbr.rel (0) target = $region21
  $region20: #{forward.2} parent=0 // pred_region
    _
  $region21: #{forward.2} parent=0 // pred_fallthru
    _
  // Predicated region
  $region22: #{forward.2} parent=0 // pred_check
    _
  $region23: #{forward.2} parent=0 // pred_check_branch
    %365 = sbr.rel (0) target = $region25
  $region24: #{forward.2} parent=0 // pred_region
    _
  $region25: #{forward.2} parent=0 // pred_fallthru
    _

</llo_original>
